<compile_context>
chip_gen: v6e
topology: v6e:2x2x1
jax: 0.10.0
libtpu: 0.0.40
codegen_flags: <defaults>
</compile_context>

<pallas_src>
import functools

import jax
import jax.numpy as jnp
from jax.experimental import pallas as pl
from jax.experimental.pallas import tpu as pltpu


def _round_up(x, m):
    return ((x + m - 1) // m) * m


def global_layer_kernel(he_ref, hv_ref, u_ref, we_ref, pk_ref,
                        out_ref, acc_ref, *,
                        outdim, nodedim, globaldim, n_pad_cols):
    f32 = jnp.float32
    i = pl.program_id(0)
    n_steps = pl.num_programs(0)

    @pl.when(i == 0)
    def _init():
        acc_ref[...] = jnp.zeros_like(acc_ref)

    # ---- edge stream: one fused gate|info matmul per lane-dense tile ----------
    edge = jnp.dot(we_ref[...], he_ref[...], preferred_element_type=f32)   # [2O, T] f32
    be = pk_ref[...][:, 0:1]                                               # [2O, 1] f32
    gate = edge[:outdim] + be[:outdim]      # sublane slice at row O (8-aligned): free
    info = edge[outdim:] + be[outdim:]
    acc_ref[...] += jax.nn.sigmoid(gate) * info                            # stays lane-wide

    # ---- epilogue: single cross-lane reduce + tiny node/global branches -------
    @pl.when(i == n_steps - 1)
    def _epilogue():
        pk = pk_ref[...]                                                   # [2O, P] f32

        edge_sum = jnp.sum(acc_ref[...], axis=1, keepdims=True)            # [O, 1]
        if n_pad_cols:
            # Padded (zero) he columns each contributed sigmoid(b_gate)*b_info; undo once.
            be_g = pk[:outdim, 0:1]
            be_i = pk[outdim:, 0:1]
            edge_sum = edge_sum - jnp.float32(n_pad_cols) * jax.nn.sigmoid(be_g) * be_i

        # Node branch: VPU broadcast-MACs over tiny static K = nodedim.
        hv = hv_ref[...]                                                   # [nodedim, V] f32
        wn = pk[:, 1:1 + nodedim]                                          # [2O, nodedim]
        node = pk[:, 1 + nodedim:2 + nodedim]                              # bias [2O, 1]
        for c in range(nodedim):                                           # static tiny K
            node = node + wn[:, c:c + 1] * hv[c:c + 1, :]                  # [2O, V]
        node_sum = jnp.sum(jax.nn.sigmoid(node[:outdim]) * node[outdim:],
                           axis=1, keepdims=True)                          # [O, 1]

        # Global branch: SMEM scalars, tiny static K = globaldim.
        wg = pk[:, 2 + nodedim:2 + nodedim + globaldim]
        glo = pk[:, 2 + nodedim + globaldim:3 + nodedim + globaldim]       # bias [2O, 1]
        for c in range(globaldim):                                         # static tiny K
            glo = glo + wg[:, c:c + 1] * u_ref[c]
        glo_term = jax.nn.sigmoid(glo[:outdim]) * glo[outdim:]             # [O, 1]

        out_ref[...] = edge_sum + node_sum + glo_term                      # single store


def global_layer(u, h_v, h_e, params, outdim, *,
                 max_tile_cols=2048, edge_dtype=jnp.bfloat16):
    """u: [1, globaldim], h_v: [1, V, nodedim], h_e: [1, V, V, edgedim] -> [1, outdim]."""
    we, be, wn, bn, wg, bg = params                     # weights: [in_dim, 2*outdim]
    _, V, _, edgedim = h_e.shape
    nodedim = h_v.shape[-1]
    globaldim = u.shape[-1]
    n_edges = V * V
    f32 = jnp.float32

    # ---- host-side layout plumbing --------------------------------------------
    # Fused gate|info edge weight: rows 0:outdim = gate, outdim:2*outdim = info.
    we_k = we.T.astype(edge_dtype)                                          # [2O, edgedim]
    # Pack ALL remaining tiny f32 params into one operand:
    #   col 0: edge bias | cols 1..nodedim: node weight | col 1+nodedim: node bias
    #   next globaldim cols: global weight | last col: global bias
    pk = jnp.concatenate(
        [be.reshape(2 * outdim, 1), wn.T, bn.reshape(2 * outdim, 1),
         wg.T, bg.reshape(2 * outdim, 1)], axis=1).astype(f32)              # [2O, P]

    # Lane-dense edge stream [edgedim, V*V] bf16 (zero-padded; corrected in epilogue).
    he_t = h_e.reshape(n_edges, edgedim).T.astype(edge_dtype)

    n_pad = _round_up(n_edges, 128)
    if n_pad <= max_tile_cols:
        tile_cols = n_pad                 # whole edge tensor in ONE block (common case)
    else:
        tile_cols = max_tile_cols         # very large V: big lane-dense tiles
        n_pad = _round_up(n_edges, tile_cols)
    steps = n_pad // tile_cols
    he_t = jnp.pad(he_t, ((0, 0), (0, n_pad - n_edges)))

    hv_t = h_v.reshape(V, nodedim).T.astype(f32)                            # [nodedim, V]
    u_s = u.reshape(globaldim).astype(f32)                                  # SMEM scalars

    const = lambda i: (0, 0)
    in_specs = [
        pl.BlockSpec((edgedim, tile_cols), lambda i: (0, i)),
        pl.BlockSpec((nodedim, V), const),
        pl.BlockSpec(memory_space=pltpu.MemorySpace.SMEM),
        pl.BlockSpec((2 * outdim, edgedim), const),
        pl.BlockSpec((2 * outdim, pk.shape[1]), const),
    ]

    # VMEM actually needed: double-buffered he tile + f32 lane-wide accumulator + params.
    vmem_bytes = (2 * _round_up(edgedim, 16) * tile_cols * 2
                  + _round_up(outdim, 8) * tile_cols * 4
                  + 256 * 1024)
    vmem_limit = max(4 * vmem_bytes, 2 * 1024 * 1024)

    cost = pl.CostEstimate(
        flops=int(4 * outdim * edgedim * n_pad
                  + 4 * outdim * (nodedim * V + globaldim)
                  + 3 * outdim * (n_pad + V + 1)),
        transcendentals=int(outdim * (n_pad + V + 1)),
        bytes_accessed=int(sum(int(a.size) * a.dtype.itemsize
                               for a in (he_t, hv_t, u_s, we_k, pk)) + outdim * 4),
    )

    out = pl.pallas_call(
        functools.partial(global_layer_kernel, outdim=outdim, nodedim=nodedim,
                          globaldim=globaldim, n_pad_cols=n_pad - n_edges),
        out_shape=jax.ShapeDtypeStruct((outdim, 1), f32),
        grid=(steps,),
        in_specs=in_specs,
        out_specs=pl.BlockSpec((outdim, 1), const),
        scratch_shapes=[pltpu.VMEM((outdim, tile_cols), f32)],
        compiler_params=pltpu.CompilerParams(
            dimension_semantics=("arbitrary",),
            vmem_limit_bytes=int(vmem_limit)),
        cost_estimate=cost,
    )(he_t, hv_t, u_s, we_k, pk)

    # Single [outdim, 1] store inside the kernel; trivial XLA reshape to the [1, outdim] row.
    return out.reshape(1, outdim)


def reference_forward(u, h_v, h_e, params, outdim, edge_dtype=jnp.bfloat16):
    """Pure-JAX reference of the PyTorch forward (channels-last math).

    The edge inputs/weights are quantized to the same bf16 the kernel streams, so the
    check isolates layout/fusion correctness from the intentional bf16 input cast.
    """
    we, be, wn, bn, wg, bg = params
    f32 = jnp.float32
    hp = jax.lax.Precision.HIGHEST
    he_q = h_e.astype(edge_dtype).astype(f32)
    we_q = we.astype(edge_dtype).astype(f32)
    edge = jnp.einsum('bvwc,co->bvwo', he_q, we_q, precision=hp) + be   # [1,V,V,2O]
    node = jnp.einsum('bvc,co->bvo', h_v, wn, precision=hp) + bn        # [1,V,2O]
    glo = jnp.dot(u, wg, precision=hp) + bg                             # [1,2O]
    e = jax.nn.sigmoid(edge[..., :outdim]) * edge[..., outdim:]
    n = jax.nn.sigmoid(node[..., :outdim]) * node[..., outdim:]
    g = jax.nn.sigmoid(glo[:, :outdim]) * glo[:, outdim:]
    return g + n.sum(axis=1) + e.sum(axis=(1, 2))


def make_params(key, nodedim, edgedim, globaldim, outdim):
    """Deterministic synthetic parameters; layout is [in_dim, 2*outdim]."""
    k = jax.random.split(key, 6)
    scale = 0.1
    we = scale * jax.random.normal(k[0], (edgedim, 2 * outdim), jnp.float32)
    be = scale * jax.random.normal(k[1], (1, 2 * outdim), jnp.float32)
    wn = scale * jax.random.normal(k[2], (nodedim, 2 * outdim), jnp.float32)
    bn = scale * jax.random.normal(k[3], (1, 2 * outdim), jnp.float32)
    wg = scale * jax.random.normal(k[4], (globaldim, 2 * outdim), jnp.float32)
    bg = scale * jax.random.normal(k[5], (1, 2 * outdim), jnp.float32)
    return we, be, wn, bn, wg, bg


if __name__ == "__main__":
    nodedim, edgedim, globaldim, outdim = 4, 6, 5, 16
    V = 24   # V*V = 576 edges -> padded to 640 lane columns -> single block, grid=(1,)

    key = jax.random.PRNGKey(0)
    k_u, k_v, k_e, k_p = jax.random.split(key, 4)

    u = jax.random.normal(k_u, (1, globaldim), jnp.float32)
    h_v = jax.random.normal(k_v, (1, V, nodedim), jnp.float32)
    h_e = jax.random.normal(k_e, (1, V, V, edgedim), jnp.float32)
    params = make_params(k_p, nodedim, edgedim, globaldim, outdim)

    out = global_layer(u, h_v, h_e, params, outdim)
    out = jax.block_until_ready(out)

    ref = reference_forward(u, h_v, h_e, params, outdim)
    assert out.shape == (1, outdim)
    assert jnp.allclose(out, ref, atol=1e-3, rtol=1e-3), "mismatch vs JAX reference"

    print("KERNEL_OK")
</pallas_src>

<mosaic_0001>
module attributes {stable_mosaic.version = 11 : i64} {
  func.func @global_layer_kernel(%arg0: i32, %arg1: memref<6x640xbf16, #tpu.memory_space<vmem>>, %arg2: memref<4x24xf32, #tpu.memory_space<vmem>>, %arg3: memref<5xf32, #tpu.memory_space<smem>>, %arg4: memref<32x6xbf16, #tpu.memory_space<vmem>>, %arg5: memref<32x12xf32, #tpu.memory_space<vmem>>, %arg6: memref<16x1xf32, #tpu.memory_space<vmem>>, %arg7: memref<16x640xf32, #tpu.memory_space<vmem>>) attributes {dimension_semantics = [#tpu.dimension_semantics<arbitrary>], iteration_bounds = array<i64: 1>, scalar_prefetch = 0 : i64, scratch_operands = 1 : i64, tpu.core_type = #tpu.core_type<tc>, window_params = [{transform_indices = @transform_0, window_bounds = array<i64: 6, 640>}, {pipeline_mode = #tpu.pipeline_mode<synchronous>, transform_indices = @transform_1, window_bounds = array<i64: 4, 24>}, {transform_indices = @transform_2, window_bounds = array<i64: 5>}, {pipeline_mode = #tpu.pipeline_mode<synchronous>, transform_indices = @transform_3, window_bounds = array<i64: 32, 6>}, {pipeline_mode = #tpu.pipeline_mode<synchronous>, transform_indices = @transform_4, window_bounds = array<i64: 32, 12>}, {pipeline_mode = #tpu.pipeline_mode<synchronous>, transform_indices = @transform_5, window_bounds = array<i64: 16, 1>}]} {
    %c0_i32 = arith.constant 0 : i32
    %0 = arith.cmpi eq, %arg0, %c0_i32 : i32
    %1 = arith.extui %0 : i1 to i32
    %c0_i32_0 = arith.constant 0 : i32
    %2 = arith.cmpi ne, %1, %c0_i32_0 : i32
    scf.if %2 {
      %cst_13 = arith.constant 0.000000e+00 : f32
      %28 = vector.broadcast %cst_13 : f32 to vector<16x640xf32>
      %c0_14 = arith.constant 0 : index
      %c0_15 = arith.constant 0 : index
      %29 = vector.load %arg7[%c0_14, %c0_15] : memref<16x640xf32, #tpu.memory_space<vmem>>, vector<16x640xf32>
      tpu.vector_store %arg7[%c0_14, %c0_15], %28 {strides = array<i32>} : memref<16x640xf32, #tpu.memory_space<vmem>>, vector<16x640xf32>,
    } else {
    }
    %c0 = arith.constant 0 : index
    %c0_1 = arith.constant 0 : index
    %3 = vector.load %arg4[%c0, %c0_1] : memref<32x6xbf16, #tpu.memory_space<vmem>>, vector<32x6xbf16>
    %c0_2 = arith.constant 0 : index
    %c0_3 = arith.constant 0 : index
    %4 = vector.load %arg1[%c0_2, %c0_3] : memref<6x640xbf16, #tpu.memory_space<vmem>>, vector<6x640xbf16>
    %cst = arith.constant dense<0.000000e+00> : vector<32x640xf32>
    %5 = tpu.matmul %3, %4, %cst {dimension_numbers = #tpu.dot_dimension_numbers<[1], [0], [0], [1], [0, 0, 1, 1], [], []>} : vector<32x6xbf16>, vector<6x640xbf16>, vector<32x640xf32> -> vector<32x640xf32>
    %c0_4 = arith.constant 0 : index
    %c0_5 = arith.constant 0 : index
    %6 = vector.load %arg5[%c0_4, %c0_5] : memref<32x12xf32, #tpu.memory_space<vmem>>, vector<32x12xf32>
    %7 = vector.extract_strided_slice %6 {offsets = [0, 0], sizes = [32, 1], strides = [1, 1]} : vector<32x12xf32> to vector<32x1xf32>
    %8 = vector.extract_strided_slice %5 {offsets = [0, 0], sizes = [16, 640], strides = [1, 1]} : vector<32x640xf32> to vector<16x640xf32>
    %9 = vector.extract_strided_slice %7 {offsets = [0, 0], sizes = [16, 1], strides = [1, 1]} : vector<32x1xf32> to vector<16x1xf32>
    %10 = vector.broadcast %9 : vector<16x1xf32> to vector<16x640xf32>
    %11 = arith.addf %8, %10 : vector<16x640xf32>
    %12 = vector.extract_strided_slice %5 {offsets = [16, 0], sizes = [16, 640], strides = [1, 1]} : vector<32x640xf32> to vector<16x640xf32>
    %13 = vector.extract_strided_slice %7 {offsets = [16, 0], sizes = [16, 1], strides = [1, 1]} : vector<32x1xf32> to vector<16x1xf32>
    %14 = vector.broadcast %13 : vector<16x1xf32> to vector<16x640xf32>
    %15 = arith.addf %12, %14 : vector<16x640xf32>
    %c0_6 = arith.constant 0 : index
    %c0_7 = arith.constant 0 : index
    %16 = vector.load %arg7[%c0_6, %c0_7] : memref<16x640xf32, #tpu.memory_space<vmem>>, vector<16x640xf32>
    %17 = arith.negf %11 : vector<16x640xf32>
    %18 = math.exp %17 : vector<16x640xf32>
    %cst_8 = arith.constant 1.000000e+00 : f32
    %19 = vector.broadcast %cst_8 : f32 to vector<16x640xf32>
    %20 = arith.addf %19, %18 : vector<16x640xf32>
    %21 = arith.divf %19, %20 : vector<16x640xf32>
    %22 = arith.mulf %21, %15 : vector<16x640xf32>
    %23 = arith.addf %16, %22 : vector<16x640xf32>
    %c0_9 = arith.constant 0 : index
    %c0_10 = arith.constant 0 : index
    %24 = vector.load %arg7[%c0_9, %c0_10] : memref<16x640xf32, #tpu.memory_space<vmem>>, vector<16x640xf32>
    tpu.vector_store %arg7[%c0_9, %c0_10], %23 {strides = array<i32>} : memref<16x640xf32, #tpu.memory_space<vmem>>, vector<16x640xf32>,
    %c0_i32_11 = arith.constant 0 : i32
    %25 = arith.cmpi eq, %arg0, %c0_i32_11 : i32
    %26 = arith.extui %25 : i1 to i32
    %c0_i32_12 = arith.constant 0 : i32
    %27 = arith.cmpi ne, %26, %c0_i32_12 : i32
    scf.if %27 {
      %c0_13 = arith.constant 0 : index
      %c0_14 = arith.constant 0 : index
      %28 = vector.load %arg5[%c0_13, %c0_14] : memref<32x12xf32, #tpu.memory_space<vmem>>, vector<32x12xf32>
      %c0_15 = arith.constant 0 : index
      %c0_16 = arith.constant 0 : index
      %29 = vector.load %arg7[%c0_15, %c0_16] : memref<16x640xf32, #tpu.memory_space<vmem>>, vector<16x640xf32>
      %cst_17 = arith.constant dense<0.000000e+00> : vector<16xf32>
      %30 = vector.multi_reduction <add>, %29, %cst_17 [1] : vector<16x640xf32> to vector<16xf32>
      %31 = vector.shape_cast %30 : vector<16xf32> to vector<16x1xf32>
      %32 = vector.extract_strided_slice %28 {offsets = [0, 0], sizes = [16, 1], strides = [1, 1]} : vector<32x12xf32> to vector<16x1xf32>
      %33 = vector.extract_strided_slice %28 {offsets = [16, 0], sizes = [16, 1], strides = [1, 1]} : vector<32x12xf32> to vector<16x1xf32>
      %34 = arith.negf %32 : vector<16x1xf32>
      %35 = math.exp %34 : vector<16x1xf32>
      %cst_18 = arith.constant 1.000000e+00 : f32
      %36 = vector.broadcast %cst_18 : f32 to vector<16x1xf32>
      %37 = arith.addf %36, %35 : vector<16x1xf32>
      %38 = arith.divf %36, %37 : vector<16x1xf32>
      %cst_19 = arith.constant 6.400000e+01 : f32
      %39 = vector.broadcast %cst_19 : f32 to vector<16x1xf32>
      %40 = arith.mulf %39, %38 : vector<16x1xf32>
      %41 = arith.mulf %40, %33 : vector<16x1xf32>
      %42 = arith.subf %31, %41 : vector<16x1xf32>
      %c0_20 = arith.constant 0 : index
      %c0_21 = arith.constant 0 : index
      %43 = vector.load %arg2[%c0_20, %c0_21] : memref<4x24xf32, #tpu.memory_space<vmem>>, vector<4x24xf32>
      %44 = vector.extract_strided_slice %28 {offsets = [0, 1], sizes = [32, 4], strides = [1, 1]} : vector<32x12xf32> to vector<32x4xf32>
      %45 = vector.extract_strided_slice %28 {offsets = [0, 5], sizes = [32, 1], strides = [1, 1]} : vector<32x12xf32> to vector<32x1xf32>
      %46 = vector.extract_strided_slice %44 {offsets = [0, 0], sizes = [32, 1], strides = [1, 1]} : vector<32x4xf32> to vector<32x1xf32>
      %47 = vector.extract_strided_slice %43 {offsets = [0, 0], sizes = [1, 24], strides = [1, 1]} : vector<4x24xf32> to vector<1x24xf32>
      %48 = vector.broadcast %46 : vector<32x1xf32> to vector<32x24xf32>
      %49 = vector.broadcast %47 : vector<1x24xf32> to vector<32x24xf32>
      %50 = arith.mulf %48, %49 : vector<32x24xf32>
      %51 = vector.broadcast %45 : vector<32x1xf32> to vector<32x24xf32>
      %52 = arith.addf %51, %50 : vector<32x24xf32>
      %53 = vector.extract_strided_slice %44 {offsets = [0, 1], sizes = [32, 1], strides = [1, 1]} : vector<32x4xf32> to vector<32x1xf32>
      %54 = vector.extract_strided_slice %43 {offsets = [1, 0], sizes = [1, 24], strides = [1, 1]} : vector<4x24xf32> to vector<1x24xf32>
      %55 = vector.broadcast %53 : vector<32x1xf32> to vector<32x24xf32>
      %56 = vector.broadcast %54 : vector<1x24xf32> to vector<32x24xf32>
      %57 = arith.mulf %55, %56 : vector<32x24xf32>
      %58 = arith.addf %52, %57 : vector<32x24xf32>
      %59 = vector.extract_strided_slice %44 {offsets = [0, 2], sizes = [32, 1], strides = [1, 1]} : vector<32x4xf32> to vector<32x1xf32>
      %60 = vector.extract_strided_slice %43 {offsets = [2, 0], sizes = [1, 24], strides = [1, 1]} : vector<4x24xf32> to vector<1x24xf32>
      %61 = vector.broadcast %59 : vector<32x1xf32> to vector<32x24xf32>
      %62 = vector.broadcast %60 : vector<1x24xf32> to vector<32x24xf32>
      %63 = arith.mulf %61, %62 : vector<32x24xf32>
      %64 = arith.addf %58, %63 : vector<32x24xf32>
      %65 = vector.extract_strided_slice %44 {offsets = [0, 3], sizes = [32, 1], strides = [1, 1]} : vector<32x4xf32> to vector<32x1xf32>
      %66 = vector.extract_strided_slice %43 {offsets = [3, 0], sizes = [1, 24], strides = [1, 1]} : vector<4x24xf32> to vector<1x24xf32>
      %67 = vector.broadcast %65 : vector<32x1xf32> to vector<32x24xf32>
      %68 = vector.broadcast %66 : vector<1x24xf32> to vector<32x24xf32>
      %69 = arith.mulf %67, %68 : vector<32x24xf32>
      %70 = arith.addf %64, %69 : vector<32x24xf32>
      %71 = vector.extract_strided_slice %70 {offsets = [0, 0], sizes = [16, 24], strides = [1, 1]} : vector<32x24xf32> to vector<16x24xf32>
      %72 = arith.negf %71 : vector<16x24xf32>
      %73 = math.exp %72 : vector<16x24xf32>
      %cst_22 = arith.constant 1.000000e+00 : f32
      %74 = vector.broadcast %cst_22 : f32 to vector<16x24xf32>
      %75 = arith.addf %74, %73 : vector<16x24xf32>
      %76 = arith.divf %74, %75 : vector<16x24xf32>
      %77 = vector.extract_strided_slice %70 {offsets = [16, 0], sizes = [16, 24], strides = [1, 1]} : vector<32x24xf32> to vector<16x24xf32>
      %78 = arith.mulf %76, %77 : vector<16x24xf32>
      %cst_23 = arith.constant dense<0.000000e+00> : vector<16xf32>
      %79 = vector.multi_reduction <add>, %78, %cst_23 [1] : vector<16x24xf32> to vector<16xf32>
      %80 = vector.shape_cast %79 : vector<16xf32> to vector<16x1xf32>
      %81 = vector.extract_strided_slice %28 {offsets = [0, 6], sizes = [32, 5], strides = [1, 1]} : vector<32x12xf32> to vector<32x5xf32>
      %82 = vector.extract_strided_slice %28 {offsets = [0, 11], sizes = [32, 1], strides = [1, 1]} : vector<32x12xf32> to vector<32x1xf32>
      %83 = vector.extract_strided_slice %81 {offsets = [0, 0], sizes = [32, 1], strides = [1, 1]} : vector<32x5xf32> to vector<32x1xf32>
      %c0_24 = arith.constant 0 : index
      %84 = memref.load %arg3[%c0_24] : memref<5xf32, #tpu.memory_space<smem>>
      %85 = vector.broadcast %84 : f32 to vector<32x1xf32>
      %86 = arith.mulf %83, %85 : vector<32x1xf32>
      %87 = arith.addf %82, %86 : vector<32x1xf32>
      %88 = vector.extract_strided_slice %81 {offsets = [0, 1], sizes = [32, 1], strides = [1, 1]} : vector<32x5xf32> to vector<32x1xf32>
      %c1 = arith.constant 1 : index
      %89 = memref.load %arg3[%c1] : memref<5xf32, #tpu.memory_space<smem>>
      %90 = vector.broadcast %89 : f32 to vector<32x1xf32>
      %91 = arith.mulf %88, %90 : vector<32x1xf32>
      %92 = arith.addf %87, %91 : vector<32x1xf32>
      %93 = vector.extract_strided_slice %81 {offsets = [0, 2], sizes = [32, 1], strides = [1, 1]} : vector<32x5xf32> to vector<32x1xf32>
      %c2 = arith.constant 2 : index
      %94 = memref.load %arg3[%c2] : memref<5xf32, #tpu.memory_space<smem>>
      %95 = vector.broadcast %94 : f32 to vector<32x1xf32>
      %96 = arith.mulf %93, %95 : vector<32x1xf32>
      %97 = arith.addf %92, %96 : vector<32x1xf32>
      %98 = vector.extract_strided_slice %81 {offsets = [0, 3], sizes = [32, 1], strides = [1, 1]} : vector<32x5xf32> to vector<32x1xf32>
      %c3 = arith.constant 3 : index
      %99 = memref.load %arg3[%c3] : memref<5xf32, #tpu.memory_space<smem>>
      %100 = vector.broadcast %99 : f32 to vector<32x1xf32>
      %101 = arith.mulf %98, %100 : vector<32x1xf32>
      %102 = arith.addf %97, %101 : vector<32x1xf32>
      %103 = vector.extract_strided_slice %81 {offsets = [0, 4], sizes = [32, 1], strides = [1, 1]} : vector<32x5xf32> to vector<32x1xf32>
      %c4 = arith.constant 4 : index
      %104 = memref.load %arg3[%c4] : memref<5xf32, #tpu.memory_space<smem>>
      %105 = vector.broadcast %104 : f32 to vector<32x1xf32>
      %106 = arith.mulf %103, %105 : vector<32x1xf32>
      %107 = arith.addf %102, %106 : vector<32x1xf32>
      %108 = vector.extract_strided_slice %107 {offsets = [0, 0], sizes = [16, 1], strides = [1, 1]} : vector<32x1xf32> to vector<16x1xf32>
      %109 = arith.negf %108 : vector<16x1xf32>
      %110 = math.exp %109 : vector<16x1xf32>
      %cst_25 = arith.constant 1.000000e+00 : f32
      %111 = vector.broadcast %cst_25 : f32 to vector<16x1xf32>
      %112 = arith.addf %111, %110 : vector<16x1xf32>
      %113 = arith.divf %111, %112 : vector<16x1xf32>
      %114 = vector.extract_strided_slice %107 {offsets = [16, 0], sizes = [16, 1], strides = [1, 1]} : vector<32x1xf32> to vector<16x1xf32>
      %115 = arith.mulf %113, %114 : vector<16x1xf32>
      %116 = arith.addf %42, %80 : vector<16x1xf32>
      %117 = arith.addf %116, %115 : vector<16x1xf32>
      %c0_26 = arith.constant 0 : index
      %c0_27 = arith.constant 0 : index
      %118 = vector.load %arg6[%c0_26, %c0_27] : memref<16x1xf32, #tpu.memory_space<vmem>>, vector<16x1xf32>
      tpu.vector_store %arg6[%c0_26, %c0_27], %117 {strides = array<i32>} : memref<16x1xf32, #tpu.memory_space<vmem>>, vector<16x1xf32>,
    } else {
    }
    return
  }
  func.func @transform_0(%arg0: i32) -> (i32, i32) {
    %c0_i32 = arith.constant 0 : i32
    %c0_i32_0 = arith.constant 0 : i32
    return %c0_i32, %arg0 : i32, i32
  }
  func.func @transform_1(%arg0: i32) -> (i32, i32) {
    %c0_i32 = arith.constant 0 : i32
    %c0_i32_0 = arith.constant 0 : i32
    %c0_i32_1 = arith.constant 0 : i32
    return %c0_i32, %c0_i32_0 : i32, i32
  }
  func.func @transform_2(%arg0: i32) -> i32 {
    %c0_i32 = arith.constant 0 : i32
    %c0_i32_0 = arith.constant 0 : i32
    return %c0_i32 : i32
  }
  func.func @transform_3(%arg0: i32) -> (i32, i32) {
    %c0_i32 = arith.constant 0 : i32
    %c0_i32_0 = arith.constant 0 : i32
    %c0_i32_1 = arith.constant 0 : i32
    return %c0_i32, %c0_i32_0 : i32, i32
  }
  func.func @transform_4(%arg0: i32) -> (i32, i32) {
    %c0_i32 = arith.constant 0 : i32
    %c0_i32_0 = arith.constant 0 : i32
    %c0_i32_1 = arith.constant 0 : i32
    return %c0_i32, %c0_i32_0 : i32, i32
  }
  func.func @transform_5(%arg0: i32) -> (i32, i32) {
    %c0_i32 = arith.constant 0 : i32
    %c0_i32_0 = arith.constant 0 : i32
    %c0_i32_1 = arith.constant 0 : i32
    return %c0_i32, %c0_i32_0 : i32, i32
  }
}

</mosaic_0001>

<llo_original>
// kernel: tpu_custom_call.1
$region0: #{tpu_custom_call.1}
  #allocation0 [shape = 'u32[]', space=smem, size = 0x4, offset = 0x4, fixed_abs, tag = 'smem constant byte address 0x4 - core index']
  #allocation1 [shape = 'u32[144,128]{1,0:T(1,128)}', space=vmem, size = 0x12000, scoped, tag = 'internal scratch']
  #allocation2 [shape = 'f32[16,640]{1,0:T(8,128)}', space=vmem, size = 0xa000, scoped, tag = 'scratch operand']
  %s0 = inlined_call_operand.vmem [shape: bf16[6,640], index: 0, kind: input, shape index: {}]
  %s1 = inlined_call_operand.vmem [shape: f32[4,24], index: 1, kind: input, shape index: {}]
  %s2 = inlined_call_operand.vmem [shape: f32[5], index: 2, kind: input, shape index: {}]
  %s3 = inlined_call_operand.vmem [shape: bf16[32,6], index: 3, kind: input, shape index: {}]
  %s4 = inlined_call_operand.vmem [shape: f32[32,12], index: 4, kind: input, shape index: {}]
  %s5 = inlined_call_operand.vmem [shape: f32[16,1], index: 5, kind: output, shape index: {}]
  %s6 = sld [smem:[#allocation0]]
  $region42: #{tpu_custom_call.1} parent=0
    _
  %s8 = ssub.s32 1, %s6
  %s9 = scalar_select 0, %s8, %s6
  $region1: #{tpu_custom_call.1} parent=0
    #allocation3 [shape = 'u8[512]{0}', space=smem, size = 0x200, scoped, tag = 'input window, operand 2, single buffered']
    #allocation4 [shape = 's32[1]{0}', space=sflag, size = 0x4, scoped, tag = 'scoped memory for tpu_custom_call.1']
    %10 = vsyncpa [#allocation4], 0
    // Predicated region
    $region2: #{tpu_custom_call.1} parent=1 // pred_check
      _
    $region3: #{tpu_custom_call.1} parent=1 // pred_check_branch
      %12 = sbr.rel (0) target = $region5
    $region4: #{tpu_custom_call.1} parent=1 // pred_region
      _
    $region5: #{tpu_custom_call.1} parent=1 // pred_fallthru
      _
    // Predicated region
    $region6: #{tpu_custom_call.1} parent=1 // pred_check
      _
    $region7: #{tpu_custom_call.1} parent=1 // pred_check_branch
      %14 = sbr.rel (0) target = $region9
    $region8: #{tpu_custom_call.1} parent=1 // pred_region
      _
    $region9: #{tpu_custom_call.1} parent=1 // pred_fallthru
      _
    // Predicated region
    $region10: #{tpu_custom_call.1} parent=1 // pred_check
      _
    $region11: #{tpu_custom_call.1} parent=1 // pred_check_branch
      %16 = sbr.rel (0) target = $region13
    $region12: #{tpu_custom_call.1} parent=1 // pred_region
      %s18 = ssub.s32 16, 16
      %19 = vsyncadd [#allocation4], %s18
      %s21 = sshll.u32 %s2, 4
      %s22 = int_to_ptr.vmem [resolvable:$true] %s21
      %24 = dma.vmem_to_smem %s22, 16, [#allocation3], [#allocation4]
    $region13: #{tpu_custom_call.1} parent=1 // pred_fallthru
      _
    // Predicated region
    $region14: #{tpu_custom_call.1} parent=1 // pred_check
      _
    $region15: #{tpu_custom_call.1} parent=1 // pred_check_branch
      %26 = sbr.rel (0) target = $region17
    $region16: #{tpu_custom_call.1} parent=1 // pred_region
      _
    $region17: #{tpu_custom_call.1} parent=1 // pred_fallthru
      _
    // Predicated region
    $region18: #{tpu_custom_call.1} parent=1 // pred_check
      _
    $region19: #{tpu_custom_call.1} parent=1 // pred_check_branch
      %28 = sbr.rel (0) target = $region21
    $region20: #{tpu_custom_call.1} parent=1 // pred_region
      _
    $region21: #{tpu_custom_call.1} parent=1 // pred_fallthru
      _
    // Predicated region
    $region22: #{tpu_custom_call.1} parent=1 // pred_check
      _
    $region23: #{tpu_custom_call.1} parent=1 // pred_check_branch
      %30 = sbr.rel (0) target = $region25
    $region24: #{tpu_custom_call.1} parent=1 // pred_region
      %31 = dma.done [#allocation4], 16
    $region25: #{tpu_custom_call.1} parent=1 // pred_fallthru
      _
    %32 = sfence
    %p34 = scmp.eq.s32.totalorder 0, 0
    // Predicated region
    $region26: #{tpu_custom_call.1} parent=1 // pred_check
      %p35 = pneg %p34
    $region27: #{tpu_custom_call.1} parent=1 // pred_check_branch
      %37 = sbr.rel (%p35) target = $region29
    $region28: #{tpu_custom_call.1} parent=1 // pred_region
      %38 = vst [vmem:[#allocation2] sm:$0xff] 0.0
      %39 = vst [vmem:[#allocation2 + $0x8] sm:$0xff] 0.0
      %40 = vst [vmem:[#allocation2 + $0x10] sm:$0xff] 0.0
      %41 = vst [vmem:[#allocation2 + $0x18] sm:$0xff] 0.0
      %42 = vst [vmem:[#allocation2 + $0x20] sm:$0xff] 0.0
      %43 = vst [vmem:[#allocation2 + $0x28] sm:$0xff] 0.0
      %44 = vst [vmem:[#allocation2 + $0x30] sm:$0xff] 0.0
      %45 = vst [vmem:[#allocation2 + $0x38] sm:$0xff] 0.0
      %46 = vst [vmem:[#allocation2 + $0x40] sm:$0xff] 0.0
      %47 = vst [vmem:[#allocation2 + $0x48] sm:$0xff] 0.0
    $region29: #{tpu_custom_call.1} parent=1 // pred_fallthru
      _
    %v48 = vld [vmem:[%s3] sm:$0xf]
    %v49 = vld [vmem:[%s3 + $0x4] sm:$0xf]
    %v50 = vld [vmem:[%s3 + $0x8] sm:$0xf]
    %v51 = vld [vmem:[%s3 + $0xc] sm:$0xf]
    %v52 = vld [vmem:[%s0] sm:$0x77]
    %v53 = vld [vmem:[%s0 + $0x8] sm:$0x77]
    %v54 = vld [vmem:[%s0 + $0x10] sm:$0x7]
    %v59 = vunpack.c.l.b16 %v48
    %v60 = vunpack.c.l.b16 %v49
    %v61 = vunpack.c.l.b16 %v50
    %v62 = vunpack.c.l.b16 %v51
    %v63 = vpack.c.b16 %v60, %v59
    %v64 = vpack.c.b16 %v62, %v61
    %v68 = vunpack.c.l.b16 %v52
    %v69 = vunpack.c.h.b16 %v52
    %v70 = vunpack.c.l.b16 %v53
    %v71 = vunpack.c.h.b16 %v53
    %v72 = vunpack.c.l.b16 %v54
    %v73 = vpack.c.b16 %v68, %v68
    %v74 = vpack.c.b16 %v69, %v69
    %v75 = vpack.c.b16 %v70, %v70
    %v76 = vpack.c.b16 %v71, %v71
    %v77 = vpack.c.b16 %v72, %v72
    %vm78 = vcmask 48128
    %v80 = vsel %vm78, %v63, 0
    %v83 = vsel %vm78, %v64, 0
    %vm85 = vcmask 1042432
    %v87 = vsel %vm85, %v73, 0
    %v90 = vsel %vm85, %v74, 0
    %v93 = vsel %vm85, %v75, 0
    %v96 = vsel %vm85, %v76, 0
    %v99 = vsel %vm85, %v77, 0
    %101 = vmatprep.subr.bf16.mxu0 0
    %102 = vmatpush1.bf16.msra.mxu0 0
    %103 = vmatprep.subr.bf16.mxu0 0
    %104 = vmatpush1.bf16.msra.mxu0 0
    %105 = vmatprep.subr.bf16.mxu0 0
    %106 = vmatpush1.bf16.msra.mxu0 0
    %107 = vmatprep.subr.bf16.mxu0 0
    %108 = vmatpush1.bf16.msra.mxu0 0
    %109 = vmatprep.subr.bf16.mxu0 0
    %110 = vmatpush1.bf16.msra.mxu0 0
    %111 = vmatprep.subr.bf16.mxu0 0
    %112 = vmatpush1.bf16.msra.mxu0 0
    %113 = vmatprep.subr.bf16.mxu0 0
    %114 = vmatpush1.bf16.msra.mxu0 0
    %115 = vmatprep.subr.bf16.mxu0 %v90
    %116 = vmatpush1.bf16.msra.mxu0 %v87
    %117 = vmatprep.subr.bf16.mxu0 0
    %118 = vmatpush2.bf16.msra.mxu0 0
    %119 = vmatprep.subr.bf16.mxu0 0
    %120 = vmatpush2.bf16.msra.mxu0 0
    %121 = vmatprep.subr.bf16.mxu0 0
    %122 = vmatpush2.bf16.msra.mxu0 0
    %123 = vmatprep.subr.bf16.mxu0 0
    %124 = vmatpush2.bf16.msra.mxu0 0
    %125 = vmatprep.subr.bf16.mxu0 0
    %126 = vmatpush2.bf16.msra.mxu0 0
    %127 = vmatprep.subr.bf16.mxu0 0
    %128 = vmatpush2.bf16.msra.mxu0 0
    %129 = vmatprep.subr.bf16.mxu0 0
    %130 = vmatpush2.bf16.msra.mxu0 0
    %131 = vmatprep.subr.bf16.mxu0 0
    %132 = vmatpush2.bf16.msra.mxu0 0
    %133 = vmatprep.mubr.bf16.mxu0 0
    %134 = vmatmul.mubr.bf16.gmra.mxu0 %v80
    %v135 = vpop.f32.mrf.mxu0
    %v136 = vadd.f32 0.0, %v135
    %v137 = vpop.f32.mrf.mxu0
    %v138 = vadd.f32 0.0, %v137
    %v139 = vpop.f32.mrf.mxu0
    %v140 = vadd.f32 0.0, %v139
    %v141 = vpop.f32.mrf.mxu0
    %v142 = vadd.f32 0.0, %v141
    %143 = vmatprep.mubr.bf16.mxu0 0
    %144 = vmatmul.mubr.bf16.gmra.mxu0 %v83
    %v145 = vpop.f32.mrf.mxu0
    %v146 = vadd.f32 0.0, %v145
    %v147 = vpop.f32.mrf.mxu0
    %v148 = vadd.f32 0.0, %v147
    %v149 = vpop.f32.mrf.mxu0
    %v150 = vadd.f32 0.0, %v149
    %v151 = vpop.f32.mrf.mxu0
    %v152 = vadd.f32 0.0, %v151
    %153 = vdwg.mxu0
    %154 = vmatprep.subr.bf16.mxu0 0
    %155 = vmatpush1.bf16.msra.mxu0 0
    %156 = vmatprep.subr.bf16.mxu0 0
    %157 = vmatpush1.bf16.msra.mxu0 0
    %158 = vmatprep.subr.bf16.mxu0 0
    %159 = vmatpush1.bf16.msra.mxu0 0
    %160 = vmatprep.subr.bf16.mxu0 0
    %161 = vmatpush1.bf16.msra.mxu0 0
    %162 = vmatprep.subr.bf16.mxu0 0
    %163 = vmatpush1.bf16.msra.mxu0 0
    %164 = vmatprep.subr.bf16.mxu0 0
    %165 = vmatpush1.bf16.msra.mxu0 0
    %166 = vmatprep.subr.bf16.mxu0 0
    %167 = vmatpush1.bf16.msra.mxu0 0
    %168 = vmatprep.subr.bf16.mxu0 %v96
    %169 = vmatpush1.bf16.msra.mxu0 %v93
    %170 = vmatprep.subr.bf16.mxu0 0
    %171 = vmatpush2.bf16.msra.mxu0 0
    %172 = vmatprep.subr.bf16.mxu0 0
    %173 = vmatpush2.bf16.msra.mxu0 0
    %174 = vmatprep.subr.bf16.mxu0 0
    %175 = vmatpush2.bf16.msra.mxu0 0
    %176 = vmatprep.subr.bf16.mxu0 0
    %177 = vmatpush2.bf16.msra.mxu0 0
    %178 = vmatprep.subr.bf16.mxu0 0
    %179 = vmatpush2.bf16.msra.mxu0 0
    %180 = vmatprep.subr.bf16.mxu0 0
    %181 = vmatpush2.bf16.msra.mxu0 0
    %182 = vmatprep.subr.bf16.mxu0 0
    %183 = vmatpush2.bf16.msra.mxu0 0
    %184 = vmatprep.subr.bf16.mxu0 0
    %185 = vmatpush2.bf16.msra.mxu0 0
    %186 = vmatprep.mubr.bf16.mxu0 0
    %187 = vmatmul.mubr.bf16.gmra.mxu0 %v80
    %v188 = vpop.f32.mrf.mxu0
    %v189 = vadd.f32 0.0, %v188
    %v190 = vpop.f32.mrf.mxu0
    %v191 = vadd.f32 0.0, %v190
    %v192 = vpop.f32.mrf.mxu0
    %v193 = vadd.f32 0.0, %v192
    %v194 = vpop.f32.mrf.mxu0
    %v195 = vadd.f32 0.0, %v194
    %196 = vmatprep.mubr.bf16.mxu0 0
    %197 = vmatmul.mubr.bf16.gmra.mxu0 %v83
    %v198 = vpop.f32.mrf.mxu0
    %v199 = vadd.f32 0.0, %v198
    %v200 = vpop.f32.mrf.mxu0
    %v201 = vadd.f32 0.0, %v200
    %v202 = vpop.f32.mrf.mxu0
    %v203 = vadd.f32 0.0, %v202
    %v204 = vpop.f32.mrf.mxu0
    %v205 = vadd.f32 0.0, %v204
    %206 = vdwg.mxu0
    %207 = vmatprep.subr.bf16.mxu0 0
    %208 = vmatpush1.bf16.msra.mxu0 0
    %209 = vmatprep.subr.bf16.mxu0 0
    %210 = vmatpush1.bf16.msra.mxu0 0
    %211 = vmatprep.subr.bf16.mxu0 0
    %212 = vmatpush1.bf16.msra.mxu0 0
    %213 = vmatprep.subr.bf16.mxu0 0
    %214 = vmatpush1.bf16.msra.mxu0 0
    %215 = vmatprep.subr.bf16.mxu0 0
    %216 = vmatpush1.bf16.msra.mxu0 0
    %217 = vmatprep.subr.bf16.mxu0 0
    %218 = vmatpush1.bf16.msra.mxu0 0
    %219 = vmatprep.subr.bf16.mxu0 0
    %220 = vmatpush1.bf16.msra.mxu0 0
    %221 = vmatprep.subr.bf16.mxu0 0
    %222 = vmatpush1.bf16.msra.mxu0 %v99
    %223 = vmatprep.subr.bf16.mxu0 0
    %224 = vmatpush2.bf16.msra.mxu0 0
    %225 = vmatprep.subr.bf16.mxu0 0
    %226 = vmatpush2.bf16.msra.mxu0 0
    %227 = vmatprep.subr.bf16.mxu0 0
    %228 = vmatpush2.bf16.msra.mxu0 0
    %229 = vmatprep.subr.bf16.mxu0 0
    %230 = vmatpush2.bf16.msra.mxu0 0
    %231 = vmatprep.subr.bf16.mxu0 0
    %232 = vmatpush2.bf16.msra.mxu0 0
    %233 = vmatprep.subr.bf16.mxu0 0
    %234 = vmatpush2.bf16.msra.mxu0 0
    %235 = vmatprep.subr.bf16.mxu0 0
    %236 = vmatpush2.bf16.msra.mxu0 0
    %237 = vmatprep.subr.bf16.mxu0 0
    %238 = vmatpush2.bf16.msra.mxu0 0
    %239 = vmatprep.mubr.bf16.mxu0 0
    %240 = vmatmul.mubr.bf16.gmra.mxu0 %v80
    %v241 = vpop.f32.mrf.mxu0
    %v242 = vadd.f32 0.0, %v241
    %v243 = vpop.f32.mrf.mxu0
    %v244 = vpop.f32.mrf.mxu0
    %v245 = vadd.f32 0.0, %v244
    %v246 = vpop.f32.mrf.mxu0
    %247 = vmatprep.mubr.bf16.mxu0 0
    %248 = vmatmul.mubr.bf16.gmra.mxu0 %v83
    %v249 = vpop.f32.mrf.mxu0
    %v250 = vadd.f32 0.0, %v249
    %v251 = vpop.f32.mrf.mxu0
    %v252 = vpop.f32.mrf.mxu0
    %v253 = vadd.f32 0.0, %v252
    %v254 = vpop.f32.mrf.mxu0
    %255 = vdwg.mxu0
    %v256 = vld [vmem:[%s4] sm:$0xff]
    %v257 = vld [vmem:[%s4 + $0x8] sm:$0xff]
    %v258 = vld [vmem:[%s4 + $0x10] sm:$0xff]
    %v259 = vld [vmem:[%s4 + $0x18] sm:$0xff]
    %261 = vset.pattern.permute.xlu0 0
    %262 = vperm.xlu0 %261, %v256
    %v263 = vpop.permute.xlu0 %262
    %266 = vset.pattern.permute.xlu0 0
    %267 = vperm.xlu0 %266, %v257
    %v268 = vpop.permute.xlu0 %267
    %v270 = vadd.f32 %v136, %v263
    %v271 = vadd.f32 %v138, %v263
    %v272 = vadd.f32 %v189, %v263
    %v273 = vadd.f32 %v191, %v263
    %v274 = vadd.f32 %v242, %v263
    %v275 = vadd.f32 %v140, %v268
    %v276 = vadd.f32 %v142, %v268
    %v277 = vadd.f32 %v193, %v268
    %v278 = vadd.f32 %v195, %v268
    %v279 = vadd.f32 %v245, %v268
    %281 = vset.pattern.permute.xlu0 0
    %282 = vperm.xlu0 %281, %v258
    %v283 = vpop.permute.xlu0 %282
    %286 = vset.pattern.permute.xlu0 0
    %287 = vperm.xlu0 %286, %v259
    %v288 = vpop.permute.xlu0 %287
    %v290 = vadd.f32 %v146, %v283
    %v291 = vadd.f32 %v148, %v283
    %v292 = vadd.f32 %v199, %v283
    %v293 = vadd.f32 %v201, %v283
    %v294 = vadd.f32 %v250, %v283
    %v295 = vadd.f32 %v150, %v288
    %v296 = vadd.f32 %v152, %v288
    %v297 = vadd.f32 %v203, %v288
    %v298 = vadd.f32 %v205, %v288
    %v299 = vadd.f32 %v253, %v288
    %v300 = vld [vmem:[#allocation2] sm:$0xff]
    %v301 = vld [vmem:[#allocation2 + $0x8] sm:$0xff]
    %v302 = vld [vmem:[#allocation2 + $0x10] sm:$0xff]
    %v303 = vld [vmem:[#allocation2 + $0x18] sm:$0xff]
    %v304 = vld [vmem:[#allocation2 + $0x20] sm:$0xff]
    %v305 = vld [vmem:[#allocation2 + $0x28] sm:$0xff]
    %v306 = vld [vmem:[#allocation2 + $0x30] sm:$0xff]
    %v307 = vld [vmem:[#allocation2 + $0x38] sm:$0xff]
    %v308 = vld [vmem:[#allocation2 + $0x40] sm:$0xff]
    %v309 = vld [vmem:[#allocation2 + $0x48] sm:$0xff]
    %v310 = vxor.u32 %v270, 2147483648
    %v311 = vxor.u32 %v271, 2147483648
    %v312 = vxor.u32 %v272, 2147483648
    %v313 = vxor.u32 %v273, 2147483648
    %v314 = vxor.u32 %v274, 2147483648
    %v315 = vxor.u32 %v275, 2147483648
    %v316 = vxor.u32 %v276, 2147483648
    %v317 = vxor.u32 %v277, 2147483648
    %v318 = vxor.u32 %v278, 2147483648
    %v319 = vxor.u32 %v279, 2147483648
    %v320 = vmul.f32 %v310, 1.442695
    %v321 = vpow.pop %v320
    %v322 = vmul.f32 %v311, 1.442695
    %v323 = vpow.pop %v322
    %v324 = vmul.f32 %v312, 1.442695
    %v325 = vpow.pop %v324
    %v326 = vmul.f32 %v313, 1.442695
    %v327 = vpow.pop %v326
    %v328 = vmul.f32 %v314, 1.442695
    %v329 = vpow.pop %v328
    %v330 = vmul.f32 %v315, 1.442695
    %v331 = vpow.pop %v330
    %v332 = vmul.f32 %v316, 1.442695
    %v333 = vpow.pop %v332
    %v334 = vmul.f32 %v317, 1.442695
    %v335 = vpow.pop %v334
    %v336 = vmul.f32 %v318, 1.442695
    %v337 = vpow.pop %v336
    %v338 = vmul.f32 %v319, 1.442695
    %v339 = vpow.pop %v338
    %v340 = vadd.f32 %v321, 1.0
    %v341 = vadd.f32 %v323, 1.0
    %v342 = vadd.f32 %v325, 1.0
    %v343 = vadd.f32 %v327, 1.0
    %v344 = vadd.f32 %v329, 1.0
    %v345 = vadd.f32 %v331, 1.0
    %v346 = vadd.f32 %v333, 1.0
    %v347 = vadd.f32 %v335, 1.0
    %v348 = vadd.f32 %v337, 1.0
    %v349 = vadd.f32 %v339, 1.0
    %v350 = vrcp.pop %v340
    %v351 = vmul.f32 1.0, %v350
    %v352 = vrcp.pop %v341
    %v353 = vmul.f32 1.0, %v352
    %v354 = vrcp.pop %v342
    %v355 = vmul.f32 1.0, %v354
    %v356 = vrcp.pop %v343
    %v357 = vmul.f32 1.0, %v356
    %v358 = vrcp.pop %v344
    %v359 = vmul.f32 1.0, %v358
    %v360 = vrcp.pop %v345
    %v361 = vmul.f32 1.0, %v360
    %v362 = vrcp.pop %v346
    %v363 = vmul.f32 1.0, %v362
    %v364 = vrcp.pop %v347
    %v365 = vmul.f32 1.0, %v364
    %v366 = vrcp.pop %v348
    %v367 = vmul.f32 1.0, %v366
    %v368 = vrcp.pop %v349
    %v369 = vmul.f32 1.0, %v368
    %v370 = vmul.f32 %v351, %v290
    %v371 = vmul.f32 %v353, %v291
    %v372 = vmul.f32 %v355, %v292
    %v373 = vmul.f32 %v357, %v293
    %v374 = vmul.f32 %v359, %v294
    %v375 = vmul.f32 %v361, %v295
    %v376 = vmul.f32 %v363, %v296
    %v377 = vmul.f32 %v365, %v297
    %v378 = vmul.f32 %v367, %v298
    %v379 = vmul.f32 %v369, %v299
    %v380 = vadd.f32 %v300, %v370
    %v381 = vadd.f32 %v301, %v371
    %v382 = vadd.f32 %v302, %v372
    %v383 = vadd.f32 %v303, %v373
    %v384 = vadd.f32 %v304, %v374
    %v385 = vadd.f32 %v305, %v375
    %v386 = vadd.f32 %v306, %v376
    %v387 = vadd.f32 %v307, %v377
    %v388 = vadd.f32 %v308, %v378
    %v389 = vadd.f32 %v309, %v379
    %390 = vst [vmem:[#allocation2] sm:$0xff] %v380
    %391 = vst [vmem:[#allocation2 + $0x8] sm:$0xff] %v381
    %392 = vst [vmem:[#allocation2 + $0x10] sm:$0xff] %v382
    %393 = vst [vmem:[#allocation2 + $0x18] sm:$0xff] %v383
    %394 = vst [vmem:[#allocation2 + $0x20] sm:$0xff] %v384
    %395 = vst [vmem:[#allocation2 + $0x28] sm:$0xff] %v385
    %396 = vst [vmem:[#allocation2 + $0x30] sm:$0xff] %v386
    %397 = vst [vmem:[#allocation2 + $0x38] sm:$0xff] %v387
    %398 = vst [vmem:[#allocation2 + $0x40] sm:$0xff] %v388
    %399 = vst [vmem:[#allocation2 + $0x48] sm:$0xff] %v389
    // Predicated region
    $region30: #{tpu_custom_call.1} parent=1 // pred_check
      %p400 = pneg %p34
    $region31: #{tpu_custom_call.1} parent=1 // pred_check_branch
      %402 = sbr.rel (%p400) target = $region33
    $region32: #{tpu_custom_call.1} parent=1 // pred_region
      %v403 = vld [vmem:[%s4] sm:$0xff]
      %v404 = vld [vmem:[%s4 + $0x8] sm:$0xff]
      %v405 = vld [vmem:[%s4 + $0x10] sm:$0xff]
      %v406 = vld [vmem:[%s4 + $0x18] sm:$0xff]
      %v407 = vld [vmem:[#allocation2] sm:$0xff]
      %v408 = vld [vmem:[#allocation2 + $0x8] sm:$0xff]
      %v409 = vld [vmem:[#allocation2 + $0x10] sm:$0xff]
      %v410 = vld [vmem:[#allocation2 + $0x18] sm:$0xff]
      %v411 = vld [vmem:[#allocation2 + $0x20] sm:$0xff]
      %v412 = vld [vmem:[#allocation2 + $0x28] sm:$0xff]
      %v413 = vld [vmem:[#allocation2 + $0x30] sm:$0xff]
      %v414 = vld [vmem:[#allocation2 + $0x38] sm:$0xff]
      %v415 = vld [vmem:[#allocation2 + $0x40] sm:$0xff]
      %v416 = vld [vmem:[#allocation2 + $0x48] sm:$0xff]
      %v417 = vadd.f32 %v407, %v408
      %v418 = vadd.f32 %v417, %v409
      %v419 = vadd.f32 %v418, %v410
      %v420 = vadd.f32 %v419, %v411
      %421 = vadd.xlane.f32.xlu0 %v420
      %v422 = vpop.xlane.xlu0 %421
      %v423 = vadd.f32 %v412, %v413
      %v424 = vadd.f32 %v423, %v414
      %v425 = vadd.f32 %v424, %v415
      %v426 = vadd.f32 %v425, %v416
      %427 = vadd.xlane.f32.xlu0 %v426
      %v428 = vpop.xlane.xlu0 %427
      %v429 = vxor.u32 %v403, 2147483648
      %v430 = vxor.u32 %v404, 2147483648
      %v431 = vmul.f32 %v429, 1.442695
      %v432 = vpow.pop %v431
      %v433 = vmul.f32 %v430, 1.442695
      %v434 = vpow.pop %v433
      %v435 = vadd.f32 %v432, 1.0
      %v436 = vadd.f32 %v434, 1.0
      %v437 = vrcp.pop %v435
      %v438 = vmul.f32 1.0, %v437
      %v439 = vrcp.pop %v436
      %v440 = vmul.f32 1.0, %v439
      %v441 = vmul.f32 %v438, 64.0
      %v442 = vmul.f32 %v440, 64.0
      %v443 = vmul.f32 %v441, %v405
      %v444 = vmul.f32 %v442, %v406
      %v445 = vsub.f32 %v422, %v443
      %v446 = vsub.f32 %v428, %v444
      %v447 = vld [vmem:[%s1] sm:$0xf]
      %449 = vset.pattern.permute.xlu0 1
      %450 = vperm.xlu0 %449, %v403
      %v451 = vpop.permute.xlu0 %450
      %454 = vset.pattern.permute.xlu0 1
      %455 = vperm.xlu0 %454, %v404
      %v456 = vpop.permute.xlu0 %455
      %459 = vset.pattern.permute.xlu0 1
      %460 = vperm.xlu0 %459, %v405
      %v461 = vpop.permute.xlu0 %460
      %464 = vset.pattern.permute.xlu0 1
      %465 = vperm.xlu0 %464, %v406
      %v466 = vpop.permute.xlu0 %465
      %v468 = vlaneseq
      %v469 = vshrl.u32 %v468, 7
      %v470 = vsub.s32 0, %v469
      %v471 = vrot.slane %v447, %v470
      %v472 = vmul.f32 %v451, %v471
      %v473 = vmul.f32 %v456, %v471
      %v474 = vmul.f32 %v461, %v471
      %v475 = vmul.f32 %v466, %v471
      %476 = vset.pattern.permute.xlu0 5
      %477 = vperm.xlu0 %476, %v403
      %v478 = vpop.permute.xlu0 %477
      %480 = vset.pattern.permute.xlu0 5
      %481 = vperm.xlu0 %480, %v404
      %v482 = vpop.permute.xlu0 %481
      %484 = vset.pattern.permute.xlu0 5
      %485 = vperm.xlu0 %484, %v405
      %v486 = vpop.permute.xlu0 %485
      %488 = vset.pattern.permute.xlu0 5
      %489 = vperm.xlu0 %488, %v406
      %v490 = vpop.permute.xlu0 %489
      %v492 = vadd.f32 %v478, %v472
      %v493 = vadd.f32 %v482, %v473
      %v494 = vadd.f32 %v486, %v474
      %v495 = vadd.f32 %v490, %v475
      %496 = vset.pattern.permute.xlu0 2
      %497 = vperm.xlu0 %496, %v403
      %v498 = vpop.permute.xlu0 %497
      %500 = vset.pattern.permute.xlu0 2
      %501 = vperm.xlu0 %500, %v404
      %v502 = vpop.permute.xlu0 %501
      %504 = vset.pattern.permute.xlu0 2
      %505 = vperm.xlu0 %504, %v405
      %v506 = vpop.permute.xlu0 %505
      %508 = vset.pattern.permute.xlu0 2
      %509 = vperm.xlu0 %508, %v406
      %v510 = vpop.permute.xlu0 %509
      %v512 = vlaneseq
      %v513 = vshrl.u32 %v512, 7
      %v514 = vsub.s32 1, %v513
      %v515 = vrot.slane %v447, %v514
      %v516 = vmul.f32 %v498, %v515
      %v517 = vmul.f32 %v502, %v515
      %v518 = vmul.f32 %v506, %v515
      %v519 = vmul.f32 %v510, %v515
      %v520 = vadd.f32 %v492, %v516
      %v521 = vadd.f32 %v493, %v517
      %v522 = vadd.f32 %v494, %v518
      %v523 = vadd.f32 %v495, %v519
      %524 = vset.pattern.permute.xlu0 3
      %525 = vperm.xlu0 %524, %v403
      %v526 = vpop.permute.xlu0 %525
      %528 = vset.pattern.permute.xlu0 3
      %529 = vperm.xlu0 %528, %v404
      %v530 = vpop.permute.xlu0 %529
      %532 = vset.pattern.permute.xlu0 3
      %533 = vperm.xlu0 %532, %v405
      %v534 = vpop.permute.xlu0 %533
      %536 = vset.pattern.permute.xlu0 3
      %537 = vperm.xlu0 %536, %v406
      %v538 = vpop.permute.xlu0 %537
      %v540 = vlaneseq
      %v541 = vshrl.u32 %v540, 7
      %v542 = vsub.s32 2, %v541
      %v543 = vrot.slane %v447, %v542
      %v544 = vmul.f32 %v526, %v543
      %v545 = vmul.f32 %v530, %v543
      %v546 = vmul.f32 %v534, %v543
      %v547 = vmul.f32 %v538, %v543
      %v548 = vadd.f32 %v520, %v544
      %v549 = vadd.f32 %v521, %v545
      %v550 = vadd.f32 %v522, %v546
      %v551 = vadd.f32 %v523, %v547
      %552 = vset.pattern.permute.xlu0 4
      %553 = vperm.xlu0 %552, %v403
      %v554 = vpop.permute.xlu0 %553
      %556 = vset.pattern.permute.xlu0 4
      %557 = vperm.xlu0 %556, %v404
      %v558 = vpop.permute.xlu0 %557
      %560 = vset.pattern.permute.xlu0 4
      %561 = vperm.xlu0 %560, %v405
      %v562 = vpop.permute.xlu0 %561
      %564 = vset.pattern.permute.xlu0 4
      %565 = vperm.xlu0 %564, %v406
      %v566 = vpop.permute.xlu0 %565
      %v568 = vlaneseq
      %v569 = vshrl.u32 %v568, 7
      %v570 = vsub.s32 3, %v569
      %v571 = vrot.slane %v447, %v570
      %v572 = vmul.f32 %v554, %v571
      %v573 = vmul.f32 %v558, %v571
      %v574 = vmul.f32 %v562, %v571
      %v575 = vmul.f32 %v566, %v571
      %v576 = vadd.f32 %v548, %v572
      %v577 = vadd.f32 %v549, %v573
      %v578 = vadd.f32 %v550, %v574
      %v579 = vadd.f32 %v551, %v575
      %v580 = vxor.u32 %v576, 2147483648
      %v581 = vxor.u32 %v577, 2147483648
      %v582 = vmul.f32 %v580, 1.442695
      %v583 = vpow.pop %v582
      %v584 = vmul.f32 %v581, 1.442695
      %v585 = vpow.pop %v584
      %v586 = vadd.f32 %v583, 1.0
      %v587 = vadd.f32 %v585, 1.0
      %v588 = vrcp.pop %v586
      %v589 = vmul.f32 1.0, %v588
      %v590 = vrcp.pop %v587
      %v591 = vmul.f32 1.0, %v590
      %v592 = vmul.f32 %v589, %v578
      %v593 = vmul.f32 %v591, %v579
      %vm594 = vcmask 195584
      %v595 = vsel %vm594, %v592, 0.0
      %596 = vadd.xlane.f32.xlu0 %v595
      %v597 = vpop.xlane.xlu0 %596
      %v598 = vsel %vm594, %v593, 0.0
      %599 = vadd.xlane.f32.xlu0 %v598
      %v600 = vpop.xlane.xlu0 %599
      %s601 = sld [smem:[#allocation3]]
      %v602 = vstv %s601
      %v603 = vmul.f32 %v403, %v602
      %v604 = vmul.f32 %v404, %v602
      %v605 = vmul.f32 %v405, %v602
      %v606 = vmul.f32 %v406, %v602
      %611 = vrot.lane.b32.xlu0 %v603, 5
      %v612 = vpop.permute.xlu0 %611
      %613 = vrot.lane.b32.xlu0 %v604, 5
      %v614 = vpop.permute.xlu0 %613
      %615 = vrot.lane.b32.xlu0 %v605, 5
      %v616 = vpop.permute.xlu0 %615
      %617 = vrot.lane.b32.xlu0 %v606, 5
      %v618 = vpop.permute.xlu0 %617
      %v623 = vadd.f32 %v403, %v612
      %v624 = vadd.f32 %v404, %v614
      %v625 = vadd.f32 %v405, %v616
      %v626 = vadd.f32 %v406, %v618
      %s627 = sld [smem:[#allocation3 + $0x1]]
      %v628 = vstv %s627
      %v629 = vmul.f32 %v403, %v628
      %v630 = vmul.f32 %v404, %v628
      %v631 = vmul.f32 %v405, %v628
      %v632 = vmul.f32 %v406, %v628
      %637 = vrot.lane.b32.xlu0 %v629, 4
      %v638 = vpop.permute.xlu0 %637
      %639 = vrot.lane.b32.xlu0 %v630, 4
      %v640 = vpop.permute.xlu0 %639
      %641 = vrot.lane.b32.xlu0 %v631, 4
      %v642 = vpop.permute.xlu0 %641
      %643 = vrot.lane.b32.xlu0 %v632, 4
      %v644 = vpop.permute.xlu0 %643
      %v649 = vadd.f32 %v623, %v638
      %v650 = vadd.f32 %v624, %v640
      %v651 = vadd.f32 %v625, %v642
      %v652 = vadd.f32 %v626, %v644
      %s653 = sld [smem:[#allocation3 + $0x2]]
      %v654 = vstv %s653
      %v655 = vmul.f32 %v403, %v654
      %v656 = vmul.f32 %v404, %v654
      %v657 = vmul.f32 %v405, %v654
      %v658 = vmul.f32 %v406, %v654
      %663 = vrot.lane.b32.xlu0 %v655, 3
      %v664 = vpop.permute.xlu0 %663
      %665 = vrot.lane.b32.xlu0 %v656, 3
      %v666 = vpop.permute.xlu0 %665
      %667 = vrot.lane.b32.xlu0 %v657, 3
      %v668 = vpop.permute.xlu0 %667
      %669 = vrot.lane.b32.xlu0 %v658, 3
      %v670 = vpop.permute.xlu0 %669
      %v675 = vadd.f32 %v649, %v664
      %v676 = vadd.f32 %v650, %v666
      %v677 = vadd.f32 %v651, %v668
      %v678 = vadd.f32 %v652, %v670
      %s679 = sld [smem:[#allocation3 + $0x3]]
      %v680 = vstv %s679
      %v681 = vmul.f32 %v403, %v680
      %v682 = vmul.f32 %v404, %v680
      %v683 = vmul.f32 %v405, %v680
      %v684 = vmul.f32 %v406, %v680
      %689 = vrot.lane.b32.xlu0 %v681, 2
      %v690 = vpop.permute.xlu0 %689
      %691 = vrot.lane.b32.xlu0 %v682, 2
      %v692 = vpop.permute.xlu0 %691
      %693 = vrot.lane.b32.xlu0 %v683, 2
      %v694 = vpop.permute.xlu0 %693
      %695 = vrot.lane.b32.xlu0 %v684, 2
      %v696 = vpop.permute.xlu0 %695
      %v701 = vadd.f32 %v675, %v690
      %v702 = vadd.f32 %v676, %v692
      %v703 = vadd.f32 %v677, %v694
      %v704 = vadd.f32 %v678, %v696
      %s705 = sld [smem:[#allocation3 + $0x4]]
      %v706 = vstv %s705
      %v707 = vmul.f32 %v403, %v706
      %v708 = vmul.f32 %v404, %v706
      %v709 = vmul.f32 %v405, %v706
      %v710 = vmul.f32 %v406, %v706
      %715 = vrot.lane.b32.xlu0 %v707, 1
      %v716 = vpop.permute.xlu0 %715
      %717 = vrot.lane.b32.xlu0 %v708, 1
      %v718 = vpop.permute.xlu0 %717
      %719 = vrot.lane.b32.xlu0 %v709, 1
      %v720 = vpop.permute.xlu0 %719
      %721 = vrot.lane.b32.xlu0 %v710, 1
      %v722 = vpop.permute.xlu0 %721
      %v727 = vadd.f32 %v701, %v716
      %v728 = vadd.f32 %v702, %v718
      %v729 = vadd.f32 %v703, %v720
      %v730 = vadd.f32 %v704, %v722
      %v731 = vxor.u32 %v727, 2147483648
      %v732 = vxor.u32 %v728, 2147483648
      %v733 = vmul.f32 %v731, 1.442695
      %v734 = vpow.pop %v733
      %v735 = vmul.f32 %v732, 1.442695
      %v736 = vpow.pop %v735
      %v737 = vadd.f32 %v734, 1.0
      %v738 = vadd.f32 %v736, 1.0
      %v739 = vrcp.pop %v737
      %v740 = vmul.f32 1.0, %v739
      %v741 = vrcp.pop %v738
      %v742 = vmul.f32 1.0, %v741
      %v743 = vmul.f32 %v740, %v729
      %v744 = vmul.f32 %v742, %v730
      %v745 = vadd.f32 %v445, %v597
      %v746 = vadd.f32 %v446, %v600
      %749 = vrot.lane.b32.xlu0 %v743, 117
      %v750 = vpop.permute.xlu0 %749
      %751 = vrot.lane.b32.xlu0 %v744, 117
      %v752 = vpop.permute.xlu0 %751
      %v755 = vadd.f32 %v745, %v750
      %v756 = vadd.f32 %v746, %v752
      %vm757 = vcmask 7168
      %758 = vst.msk [vmem:[%s5] sm:$0xff] %vm757, %v755
      %759 = vst.msk [vmem:[%s5 + $0x8] sm:$0xff] %vm757, %v756
    $region33: #{tpu_custom_call.1} parent=1 // pred_fallthru
      _
    // Predicated region
    $region34: #{tpu_custom_call.1} parent=1 // pred_check
      _
    $region35: #{tpu_custom_call.1} parent=1 // pred_check_branch
      %761 = sbr.rel (0) target = $region37
    $region36: #{tpu_custom_call.1} parent=1 // pred_region
      _
    $region37: #{tpu_custom_call.1} parent=1 // pred_fallthru
      _
    // Predicated region
    $region38: #{tpu_custom_call.1} parent=1 // pred_check
      _
    $region39: #{tpu_custom_call.1} parent=1 // pred_check_branch
      %763 = sbr.rel (0) target = $region41
    $region40: #{tpu_custom_call.1} parent=1 // pred_region
      _
    $region41: #{tpu_custom_call.1} parent=1 // pred_fallthru
      _
    %764 = vsyncpa [#allocation4], 1

</llo_original>
